<compile_context>
chip_gen: v5e
topology: v5e:2x2
jax: 0.10.0
libtpu: 0.0.40
codegen_flags: <defaults>
</compile_context>

<pallas_src>
import math

import jax
import jax.numpy as jnp
import numpy as np
from jax.experimental import pallas as pl
from jax.experimental.pallas import tpu as pltpu


def _round_up(v, m):
    return (v + m - 1) // m * m


def _largest_divisor_leq(n, m):
    m = max(1, min(n, int(m)))
    for d in range(m, 0, -1):
        if n % d == 0:
            return d
    return 1


def _vmem_limit_bytes():
    """Generation-aware VMEM limit: ~3/4 of physical, capped at 100 MiB."""
    phys = 64 * 1024 * 1024            # conservative default (v7x per-TC VMEM)
    try:
        phys = int(pltpu.get_tpu_info().vmem_capacity_bytes)
    except Exception:
        pass
    return min(phys * 3 // 4, 100 * 1024 * 1024)


# --------------------------------------------------------------------------
# Kernel 1: gate = Sigmoid(W2 @ ReLU(W1 @ avgpool(x)))
# --------------------------------------------------------------------------
def _gate_kernel(x_ref, w1t_ref, w2t_ref, gate_ref):
    # x_ref:    (tb1, C, H*W)  input tile, spatial flattened (lane-dense), native dtype
    # w1t_ref:  (C, CR_PAD)    first Linear weight, transposed, zero-padded
    # w2t_ref:  (CR_PAD, C)    second Linear weight, transposed, zero-padded
    # gate_ref: (tb1, C)       sigmoid gate, float32
    x = x_ref[...].astype(jnp.float32)
    pooled = jnp.mean(x, axis=-1)                                    # AdaptiveAvgPool2d(1) -> (tb1, C)
    h = jnp.dot(pooled, w1t_ref[...], preferred_element_type=jnp.float32)
    h = jnp.maximum(h, 0.0)                                          # ReLU (padded cols stay 0)
    z = jnp.dot(h, w2t_ref[...], preferred_element_type=jnp.float32)
    gate_ref[...] = 1.0 / (1.0 + jnp.exp(-z))                        # Sigmoid (exp -> EUP slot)


# --------------------------------------------------------------------------
# Kernel 2: out = max_W(x) * mean_H(x) * gate + x
# --------------------------------------------------------------------------
def _apply_kernel(x_ref, gate_ref, out_ref):
    # x_ref:    (tb, tc, H, W)
    # gate_ref: (tb, tc, 1, 1)  float32
    # out_ref:  (tb, tc, H, W)
    x = x_ref[...]
    q = jnp.max(x, axis=3, keepdims=True).astype(jnp.float32)        # (tb, tc, H, 1) - max exact in any dtype
    k = jnp.mean(x.astype(jnp.float32), axis=2, keepdims=True)       # (tb, tc, 1, W) - f32 accumulation
    qkv = q * k * gate_ref[...]                                      # unit-minor-dim broadcasts only
    if x.dtype == jnp.float32:
        out = qkv + x
    else:
        # bf16/fp8 inputs: residual add in the native dtype (bf16 VPU on v6e/v7x)
        out = qkv.astype(x.dtype) + x
    out_ref[...] = out.astype(out_ref.dtype)


# --------------------------------------------------------------------------
# Wrapper
# --------------------------------------------------------------------------
def frequence_attention(x, w1, w2, *, batch_tile=None, channel_tile=None):
    """Pallas TPU implementation of Frequence_Attention.forward.

    x : (B, C, H, W)
    w1: (C // reduction, C)   weight of nn.Linear(C, C//reduction, bias=False)
    w2: (C, C // reduction)   weight of nn.Linear(C//reduction, C, bias=False)
    """
    B, C, H, W = x.shape
    cr = w1.shape[0]
    assert cr >= 1 and w1.shape == (cr, C) and w2.shape == (C, cr)

    isz = jnp.dtype(x.dtype).itemsize
    vmem_limit = _vmem_limit_bytes()
    budget = int(vmem_limit * 0.8)        # leave headroom for compiler scratch

    # Zero-pad the tiny hidden dim to a full lane width (exact: ReLU(0)=0 and
    # zero rows of W2^T contribute nothing).
    cr_pad = _round_up(cr, 128)
    w1t = jnp.zeros((C, cr_pad), jnp.float32).at[:, :cr].set(
        jnp.transpose(w1).astype(jnp.float32))
    w2t = jnp.zeros((cr_pad, C), jnp.float32).at[:cr, :].set(
        jnp.transpose(w2).astype(jnp.float32))

    # ---- stage 1 tiling: the (tb1, C) output block needs tb1 % 8 == 0 or
    # tb1 == B.  Count 2x double-buffered native input + the f32 working copy.
    hw_pad = _round_up(H * W, 128)
    per_b_gate = C * hw_pad * (2 * isz + 5) + 2 * C * 4
    cands = [d for d in range(8, B + 1, 8) if B % d == 0]
    if B not in cands:
        cands.append(B)                                   # B itself is always legal
    fitting = [d for d in cands if d * per_b_gate <= budget]
    multi = [d for d in fitting if B // d >= 2]           # >=2 grid steps -> both TCs on v7x
    if multi:
        tb1 = max(multi)
    elif fitting:
        tb1 = max(fitting)
    else:
        tb1 = min(cands)                                  # smallest legal tile (never default to B)

    gate_params = pltpu.CompilerParams(
        dimension_semantics=("parallel",),
        vmem_limit_bytes=vmem_limit,
    )

    x_flat = x.reshape(B, C, H * W)                       # free, contiguous view
    gate = pl.pallas_call(
        _gate_kernel,
        out_shape=jax.ShapeDtypeStruct((B, C), jnp.float32),
        grid_spec=pltpu.PrefetchScalarGridSpec(
            num_scalar_prefetch=0,
            grid=(B // tb1,),
            in_specs=[
                pl.BlockSpec((tb1, C, H * W), lambda i: (i, 0, 0)),
                pl.BlockSpec((C, cr_pad), lambda i: (0, 0)),
                pl.BlockSpec((cr_pad, C), lambda i: (0, 0)),
            ],
            out_specs=pl.BlockSpec((tb1, C), lambda i: (i, 0)),
        ),
        compiler_params=gate_params,
        cost_estimate=pl.CostEstimate(
            flops=int(B * C * (H * W + 4 * cr_pad)),
            transcendentals=int(B * C),
            bytes_accessed=int(x.nbytes + B * C * 4 + 2 * C * cr_pad * 4),
        ),
    )(x_flat, w1t, w2t)

    # Reshape outside the kernel (free) so kernel 2 only does easy broadcasts.
    gate4 = gate.reshape(B, C, 1, 1)

    # ---- stage 2 tiling over (batch, channel): budget counts 2x in + 2x out
    # buffers (native dtype), ~2.5x f32 temporaries (x, q*k*g, q, k) and the
    # 2x (1,1)->(8,128)-padded gate slabs.
    sub = 8 * max(1, 4 // isz)                            # sublane granule per dtype
    hp = _round_up(H, sub)
    wp = _round_up(W, 128)
    per_bc = hp * wp * (4 * isz + 10) + 2 * 8 * 128 * 4
    max_bc = max(1, budget // per_bc)

    if channel_tile is not None:
        tc = _largest_divisor_leq(C, channel_tile)
    elif C <= max_bc:
        tc = C
    else:
        tc = _largest_divisor_leq(C, max_bc)

    if batch_tile is not None:
        tb = _largest_divisor_leq(B, batch_tile)
    else:
        tb = _largest_divisor_leq(B, max(1, max_bc // tc))

    # Keep at least 2 grid steps when the problem allows it (v7x has 2 TCs that
    # are only fed via parallel grid axes; also enables software pipelining).
    if batch_tile is None and channel_tile is None and (B // tb) * (C // tc) < 2:
        if B >= 2:
            tb = _largest_divisor_leq(B, B // 2)
        elif C >= 2:
            tc = _largest_divisor_leq(C, C // 2)

    apply_params = pltpu.CompilerParams(
        dimension_semantics=("parallel", "parallel"),
        vmem_limit_bytes=vmem_limit,
    )

    out = pl.pallas_call(
        _apply_kernel,
        out_shape=jax.ShapeDtypeStruct((B, C, H, W), x.dtype),
        grid_spec=pltpu.PrefetchScalarGridSpec(
            num_scalar_prefetch=0,
            grid=(B // tb, C // tc),
            in_specs=[
                pl.BlockSpec((tb, tc, H, W), lambda i, j: (i, j, 0, 0)),
                pl.BlockSpec((tb, tc, 1, 1), lambda i, j: (i, j, 0, 0)),
            ],
            out_specs=pl.BlockSpec((tb, tc, H, W), lambda i, j: (i, j, 0, 0)),
        ),
        compiler_params=apply_params,
        cost_estimate=pl.CostEstimate(
            flops=int(5 * B * C * H * W),
            transcendentals=0,
            bytes_accessed=int(2 * x.nbytes + B * C * 4),
        ),
    )(x, gate4)
    return out


# --------------------------------------------------------------------------
# Pure-JAX reference (mirrors the PyTorch forward)
# --------------------------------------------------------------------------
def reference_forward(x, w1, w2):
    x = x.astype(jnp.float32)
    x_q_max = jnp.max(x, axis=3, keepdims=True)
    x_k_mean = jnp.mean(x, axis=2, keepdims=True)
    x_2d = jnp.mean(x, axis=(2, 3))                      # avgpool -> (B, C)
    h = jnp.maximum(x_2d @ w1.T, 0.0)
    x_v = jax.nn.sigmoid(h @ w2.T)[:, :, None, None]     # (B, C, 1, 1)
    return x_q_max * x_k_mean * x_v + x


if __name__ == "__main__":
    B, C, H, W = 8, 32, 16, 16
    reduction = 16
    cr = C // reduction                                   # hidden dim of the MLP

    key = jax.random.PRNGKey(0)
    kx, k1, k2 = jax.random.split(key, 3)
    x = jax.random.normal(kx, (B, C, H, W), dtype=jnp.float32)

    # nn.Linear default init: U(-1/sqrt(fan_in), 1/sqrt(fan_in)), bias=False
    b1 = 1.0 / math.sqrt(C)
    b2 = 1.0 / math.sqrt(cr)
    w1 = jax.random.uniform(k1, (cr, C), jnp.float32, minval=-b1, maxval=b1)
    w2 = jax.random.uniform(k2, (C, cr), jnp.float32, minval=-b2, maxval=b2)

    # Default heuristics: the apply grid has >= 2 parallel steps for B=8.
    out = frequence_attention(x, w1, w2)
    out = jax.block_until_ready(out)

    ref = jax.block_until_ready(reference_forward(x, w1, w2))
    assert out.shape == (B, C, H, W)
    np.testing.assert_allclose(np.asarray(out), np.asarray(ref), rtol=1e-4, atol=1e-4)

    print("KERNEL_OK")
</pallas_src>

<mosaic_0001>
module attributes {stable_mosaic.version = 11 : i64} {
  func.func @_gate_kernel(%arg0: i32, %arg1: memref<8x32x256xf32, #tpu.memory_space<vmem>>, %arg2: memref<32x128xf32, #tpu.memory_space<vmem>>, %arg3: memref<128x32xf32, #tpu.memory_space<vmem>>, %arg4: memref<8x32xf32, #tpu.memory_space<vmem>>) attributes {dimension_semantics = [#tpu.dimension_semantics<parallel>], iteration_bounds = array<i64: 1>, scalar_prefetch = 0 : i64, scratch_operands = 0 : i64, tpu.core_type = #tpu.core_type<tc>, window_params = [{transform_indices = @transform_0, window_bounds = array<i64: 8, 32, 256>}, {pipeline_mode = #tpu.pipeline_mode<synchronous>, transform_indices = @transform_1, window_bounds = array<i64: 32, 128>}, {pipeline_mode = #tpu.pipeline_mode<synchronous>, transform_indices = @transform_2, window_bounds = array<i64: 128, 32>}, {transform_indices = @transform_3, window_bounds = array<i64: 8, 32>}]} {
    %c0 = arith.constant 0 : index
    %c0_0 = arith.constant 0 : index
    %c0_1 = arith.constant 0 : index
    %0 = vector.load %arg1[%c0, %c0_0, %c0_1] : memref<8x32x256xf32, #tpu.memory_space<vmem>>, vector<8x32x256xf32>
    %cst = arith.constant dense<0.000000e+00> : vector<8x32xf32>
    %1 = vector.multi_reduction <add>, %0, %cst [2] : vector<8x32x256xf32> to vector<8x32xf32>
    %cst_2 = arith.constant 2.560000e+02 : f32
    %2 = vector.broadcast %cst_2 : f32 to vector<8x32xf32>
    %3 = arith.divf %1, %2 : vector<8x32xf32>
    %c0_3 = arith.constant 0 : index
    %c0_4 = arith.constant 0 : index
    %4 = vector.load %arg2[%c0_3, %c0_4] : memref<32x128xf32, #tpu.memory_space<vmem>>, vector<32x128xf32>
    %cst_5 = arith.constant dense<0.000000e+00> : vector<8x128xf32>
    %5 = tpu.matmul %3, %4, %cst_5 {dimension_numbers = #tpu.dot_dimension_numbers<[1], [0], [0], [1], [0, 0, 1, 1], [], []>} : vector<8x32xf32>, vector<32x128xf32>, vector<8x128xf32> -> vector<8x128xf32>
    %cst_6 = arith.constant 0.000000e+00 : f32
    %6 = vector.broadcast %cst_6 : f32 to vector<8x128xf32>
    %7 = arith.maximumf %5, %6 : vector<8x128xf32>
    %c0_7 = arith.constant 0 : index
    %c0_8 = arith.constant 0 : index
    %8 = vector.load %arg3[%c0_7, %c0_8] : memref<128x32xf32, #tpu.memory_space<vmem>>, vector<128x32xf32>
    %cst_9 = arith.constant dense<0.000000e+00> : vector<8x32xf32>
    %9 = tpu.matmul %7, %8, %cst_9 {dimension_numbers = #tpu.dot_dimension_numbers<[1], [0], [0], [1], [0, 0, 1, 1], [], []>} : vector<8x128xf32>, vector<128x32xf32>, vector<8x32xf32> -> vector<8x32xf32>
    %cst_10 = arith.constant 0.000000e+00 : f32
    %10 = vector.broadcast %cst_10 : f32 to vector<8x32xf32>
    %11 = arith.subf %10, %9 : vector<8x32xf32>
    %12 = math.exp %11 : vector<8x32xf32>
    %cst_11 = arith.constant 1.000000e+00 : f32
    %13 = vector.broadcast %cst_11 : f32 to vector<8x32xf32>
    %14 = arith.addf %13, %12 : vector<8x32xf32>
    %cst_12 = arith.constant 1.000000e+00 : f32
    %15 = vector.broadcast %cst_12 : f32 to vector<8x32xf32>
    %16 = arith.divf %15, %14 : vector<8x32xf32>
    %c0_13 = arith.constant 0 : index
    %c0_14 = arith.constant 0 : index
    %17 = vector.load %arg4[%c0_13, %c0_14] : memref<8x32xf32, #tpu.memory_space<vmem>>, vector<8x32xf32>
    tpu.vector_store %arg4[%c0_13, %c0_14], %16 {strides = array<i32>} : memref<8x32xf32, #tpu.memory_space<vmem>>, vector<8x32xf32>,
    return
  }
  func.func @transform_0(%arg0: i32) -> (i32, i32, i32) {
    %c0_i32 = arith.constant 0 : i32
    %c0_i32_0 = arith.constant 0 : i32
    %c0_i32_1 = arith.constant 0 : i32
    return %arg0, %c0_i32, %c0_i32_0 : i32, i32, i32
  }
  func.func @transform_1(%arg0: i32) -> (i32, i32) {
    %c0_i32 = arith.constant 0 : i32
    %c0_i32_0 = arith.constant 0 : i32
    %c0_i32_1 = arith.constant 0 : i32
    return %c0_i32, %c0_i32_0 : i32, i32
  }
  func.func @transform_2(%arg0: i32) -> (i32, i32) {
    %c0_i32 = arith.constant 0 : i32
    %c0_i32_0 = arith.constant 0 : i32
    %c0_i32_1 = arith.constant 0 : i32
    return %c0_i32, %c0_i32_0 : i32, i32
  }
  func.func @transform_3(%arg0: i32) -> (i32, i32) {
    %c0_i32 = arith.constant 0 : i32
    %c0_i32_0 = arith.constant 0 : i32
    return %arg0, %c0_i32 : i32, i32
  }
}

</mosaic_0001>

<llo_original>
// kernel: tpu_custom_call.1
$region0: #{tpu_custom_call.1}
  #allocation0 [shape = 'u32[]', space=smem, size = 0x4, offset = 0x4, fixed_abs, tag = 'smem constant byte address 0x4 - core index']
  #allocation1 [shape = 'u32[72,128]{1,0:T(1,128)}', space=vmem, size = 0x9000, scoped, tag = 'internal scratch']
  %s0 = inlined_call_operand.hbm [shape: f32[8,32,256], index: 0, kind: input, shape index: {}]
  %s1 = inlined_call_operand.vmem [shape: f32[32,128], index: 1, kind: input, shape index: {}]
  %s2 = inlined_call_operand.vmem [shape: f32[128,32], index: 2, kind: input, shape index: {}]
  %s3 = inlined_call_operand.hbm [shape: f32[8,32], index: 3, kind: output, shape index: {}]
  %s4 = sld [smem:[#allocation0]]
  $region26: #{tpu_custom_call.1} parent=0
    _
  %s6 = ssub.s32 1, %s4
  %s7 = scalar_select 0, %s6, %s4
  $region1: #{tpu_custom_call.1} parent=0
    #allocation2 [shape = 'u8[262144]{0}', space=vmem, size = 0x40000, scoped, tag = 'input window, operand 0, single buffered']
    #allocation3 [shape = 's32[1]{0}', space=sflag, size = 0x4, scoped, tag = 'scoped memory for tpu_custom_call.1']
    #allocation4 [shape = 's32[1]{0}', space=sflag, size = 0x4, scoped, tag = 'scoped memory for tpu_custom_call.1']
    #allocation5 [shape = 'u8[4096]{0}', space=vmem, size = 0x1000, scoped, tag = 'output window, operand 0, single buffered']
    %8 = vsyncpa [#allocation3], 0
    %9 = vsyncpa [#allocation4], 0
    // Predicated region
    $region2: #{tpu_custom_call.1} parent=1 // pred_check
      _
    $region3: #{tpu_custom_call.1} parent=1 // pred_check_branch
      %11 = sbr.rel (0) target = $region5
    $region4: #{tpu_custom_call.1} parent=1 // pred_region
      %13 = vsyncadd [#allocation3], 0
      %s14 = sshll.u32 %s0, 4
      %s15 = int_to_ptr.hbm [resolvable:$true] %s14
      %s16 = sshll.u32 [#allocation2], 4
      %s17 = int_to_ptr.vmem [resolvable:$true] %s16
      %22 = dma.hbm_to_vmem [thread:$0]  %s15, 8192, %s17, [#allocation3], 256, 256, 16
    $region5: #{tpu_custom_call.1} parent=1 // pred_fallthru
      _
    // Predicated region
    $region6: #{tpu_custom_call.1} parent=1 // pred_check
      _
    $region7: #{tpu_custom_call.1} parent=1 // pred_check_branch
      %24 = sbr.rel (0) target = $region9
    $region8: #{tpu_custom_call.1} parent=1 // pred_region
      _
    $region9: #{tpu_custom_call.1} parent=1 // pred_fallthru
      _
    // Predicated region
    $region10: #{tpu_custom_call.1} parent=1 // pred_check
      _
    $region11: #{tpu_custom_call.1} parent=1 // pred_check_branch
      %26 = sbr.rel (0) target = $region13
    $region12: #{tpu_custom_call.1} parent=1 // pred_region
      _
    $region13: #{tpu_custom_call.1} parent=1 // pred_fallthru
      _
    // Predicated region
    $region14: #{tpu_custom_call.1} parent=1 // pred_check
      _
    $region15: #{tpu_custom_call.1} parent=1 // pred_check_branch
      %28 = sbr.rel (0) target = $region17
    $region16: #{tpu_custom_call.1} parent=1 // pred_region
      %30 = dma.done [#allocation3], 8192
    $region17: #{tpu_custom_call.1} parent=1 // pred_fallthru
      _
    %v31 = vld [vmem:[#allocation2] sm:$0xff]
    %v32 = vld [vmem:[#allocation2 + $0x8] sm:$0xff]
    %v33 = vld [vmem:[#allocation2 + $0x10] sm:$0xff]
    %v34 = vld [vmem:[#allocation2 + $0x18] sm:$0xff]
    %v35 = vld [vmem:[#allocation2 + $0x20] sm:$0xff]
    %v36 = vld [vmem:[#allocation2 + $0x28] sm:$0xff]
    %v37 = vld [vmem:[#allocation2 + $0x30] sm:$0xff]
    %v38 = vld [vmem:[#allocation2 + $0x38] sm:$0xff]
    %v39 = vld [vmem:[#allocation2 + $0x40] sm:$0xff]
    %v40 = vld [vmem:[#allocation2 + $0x48] sm:$0xff]
    %v41 = vld [vmem:[#allocation2 + $0x50] sm:$0xff]
    %v42 = vld [vmem:[#allocation2 + $0x58] sm:$0xff]
    %v43 = vld [vmem:[#allocation2 + $0x60] sm:$0xff]
    %v44 = vld [vmem:[#allocation2 + $0x68] sm:$0xff]
    %v45 = vld [vmem:[#allocation2 + $0x70] sm:$0xff]
    %v46 = vld [vmem:[#allocation2 + $0x78] sm:$0xff]
    %v47 = vld [vmem:[#allocation2 + $0x80] sm:$0xff]
    %v48 = vld [vmem:[#allocation2 + $0x88] sm:$0xff]
    %v49 = vld [vmem:[#allocation2 + $0x90] sm:$0xff]
    %v50 = vld [vmem:[#allocation2 + $0x98] sm:$0xff]
    %v51 = vld [vmem:[#allocation2 + $0xa0] sm:$0xff]
    %v52 = vld [vmem:[#allocation2 + $0xa8] sm:$0xff]
    %v53 = vld [vmem:[#allocation2 + $0xb0] sm:$0xff]
    %v54 = vld [vmem:[#allocation2 + $0xb8] sm:$0xff]
    %v55 = vld [vmem:[#allocation2 + $0xc0] sm:$0xff]
    %v56 = vld [vmem:[#allocation2 + $0xc8] sm:$0xff]
    %v57 = vld [vmem:[#allocation2 + $0xd0] sm:$0xff]
    %v58 = vld [vmem:[#allocation2 + $0xd8] sm:$0xff]
    %v59 = vld [vmem:[#allocation2 + $0xe0] sm:$0xff]
    %v60 = vld [vmem:[#allocation2 + $0xe8] sm:$0xff]
    %v61 = vld [vmem:[#allocation2 + $0xf0] sm:$0xff]
    %v62 = vld [vmem:[#allocation2 + $0xf8] sm:$0xff]
    %v63 = vld [vmem:[#allocation2 + $0x100] sm:$0xff]
    %v64 = vld [vmem:[#allocation2 + $0x108] sm:$0xff]
    %v65 = vld [vmem:[#allocation2 + $0x110] sm:$0xff]
    %v66 = vld [vmem:[#allocation2 + $0x118] sm:$0xff]
    %v67 = vld [vmem:[#allocation2 + $0x120] sm:$0xff]
    %v68 = vld [vmem:[#allocation2 + $0x128] sm:$0xff]
    %v69 = vld [vmem:[#allocation2 + $0x130] sm:$0xff]
    %v70 = vld [vmem:[#allocation2 + $0x138] sm:$0xff]
    %v71 = vld [vmem:[#allocation2 + $0x140] sm:$0xff]
    %v72 = vld [vmem:[#allocation2 + $0x148] sm:$0xff]
    %v73 = vld [vmem:[#allocation2 + $0x150] sm:$0xff]
    %v74 = vld [vmem:[#allocation2 + $0x158] sm:$0xff]
    %v75 = vld [vmem:[#allocation2 + $0x160] sm:$0xff]
    %v76 = vld [vmem:[#allocation2 + $0x168] sm:$0xff]
    %v77 = vld [vmem:[#allocation2 + $0x170] sm:$0xff]
    %v78 = vld [vmem:[#allocation2 + $0x178] sm:$0xff]
    %v79 = vld [vmem:[#allocation2 + $0x180] sm:$0xff]
    %v80 = vld [vmem:[#allocation2 + $0x188] sm:$0xff]
    %v81 = vld [vmem:[#allocation2 + $0x190] sm:$0xff]
    %v82 = vld [vmem:[#allocation2 + $0x198] sm:$0xff]
    %v83 = vld [vmem:[#allocation2 + $0x1a0] sm:$0xff]
    %v84 = vld [vmem:[#allocation2 + $0x1a8] sm:$0xff]
    %v85 = vld [vmem:[#allocation2 + $0x1b0] sm:$0xff]
    %v86 = vld [vmem:[#allocation2 + $0x1b8] sm:$0xff]
    %v87 = vld [vmem:[#allocation2 + $0x1c0] sm:$0xff]
    %v88 = vld [vmem:[#allocation2 + $0x1c8] sm:$0xff]
    %v89 = vld [vmem:[#allocation2 + $0x1d0] sm:$0xff]
    %v90 = vld [vmem:[#allocation2 + $0x1d8] sm:$0xff]
    %v91 = vld [vmem:[#allocation2 + $0x1e0] sm:$0xff]
    %v92 = vld [vmem:[#allocation2 + $0x1e8] sm:$0xff]
    %v93 = vld [vmem:[#allocation2 + $0x1f0] sm:$0xff]
    %v94 = vld [vmem:[#allocation2 + $0x1f8] sm:$0xff]
    %v95 = vadd.f32 %v31, %v32
    %96 = vadd.xlane.f32.xlu0 %v95
    %v97 = vpop.xlane.xlu0 %96
    %v98 = vadd.f32 %v33, %v34
    %99 = vadd.xlane.f32.xlu0 %v98
    %v100 = vpop.xlane.xlu0 %99
    %v101 = vadd.f32 %v35, %v36
    %102 = vadd.xlane.f32.xlu0 %v101
    %v103 = vpop.xlane.xlu0 %102
    %v104 = vadd.f32 %v37, %v38
    %105 = vadd.xlane.f32.xlu0 %v104
    %v106 = vpop.xlane.xlu0 %105
    %v107 = vadd.f32 %v39, %v40
    %108 = vadd.xlane.f32.xlu0 %v107
    %v109 = vpop.xlane.xlu0 %108
    %v110 = vadd.f32 %v41, %v42
    %111 = vadd.xlane.f32.xlu0 %v110
    %v112 = vpop.xlane.xlu0 %111
    %v113 = vadd.f32 %v43, %v44
    %114 = vadd.xlane.f32.xlu0 %v113
    %v115 = vpop.xlane.xlu0 %114
    %v116 = vadd.f32 %v45, %v46
    %117 = vadd.xlane.f32.xlu0 %v116
    %v118 = vpop.xlane.xlu0 %117
    %v119 = vadd.f32 %v47, %v48
    %120 = vadd.xlane.f32.xlu0 %v119
    %v121 = vpop.xlane.xlu0 %120
    %v122 = vadd.f32 %v49, %v50
    %123 = vadd.xlane.f32.xlu0 %v122
    %v124 = vpop.xlane.xlu0 %123
    %v125 = vadd.f32 %v51, %v52
    %126 = vadd.xlane.f32.xlu0 %v125
    %v127 = vpop.xlane.xlu0 %126
    %v128 = vadd.f32 %v53, %v54
    %129 = vadd.xlane.f32.xlu0 %v128
    %v130 = vpop.xlane.xlu0 %129
    %v131 = vadd.f32 %v55, %v56
    %132 = vadd.xlane.f32.xlu0 %v131
    %v133 = vpop.xlane.xlu0 %132
    %v134 = vadd.f32 %v57, %v58
    %135 = vadd.xlane.f32.xlu0 %v134
    %v136 = vpop.xlane.xlu0 %135
    %v137 = vadd.f32 %v59, %v60
    %138 = vadd.xlane.f32.xlu0 %v137
    %v139 = vpop.xlane.xlu0 %138
    %v140 = vadd.f32 %v61, %v62
    %141 = vadd.xlane.f32.xlu0 %v140
    %v142 = vpop.xlane.xlu0 %141
    %v143 = vadd.f32 %v63, %v64
    %144 = vadd.xlane.f32.xlu0 %v143
    %v145 = vpop.xlane.xlu0 %144
    %v146 = vadd.f32 %v65, %v66
    %147 = vadd.xlane.f32.xlu0 %v146
    %v148 = vpop.xlane.xlu0 %147
    %v149 = vadd.f32 %v67, %v68
    %150 = vadd.xlane.f32.xlu0 %v149
    %v151 = vpop.xlane.xlu0 %150
    %v152 = vadd.f32 %v69, %v70
    %153 = vadd.xlane.f32.xlu0 %v152
    %v154 = vpop.xlane.xlu0 %153
    %v155 = vadd.f32 %v71, %v72
    %156 = vadd.xlane.f32.xlu0 %v155
    %v157 = vpop.xlane.xlu0 %156
    %v158 = vadd.f32 %v73, %v74
    %159 = vadd.xlane.f32.xlu0 %v158
    %v160 = vpop.xlane.xlu0 %159
    %v161 = vadd.f32 %v75, %v76
    %162 = vadd.xlane.f32.xlu0 %v161
    %v163 = vpop.xlane.xlu0 %162
    %v164 = vadd.f32 %v77, %v78
    %165 = vadd.xlane.f32.xlu0 %v164
    %v166 = vpop.xlane.xlu0 %165
    %v167 = vadd.f32 %v79, %v80
    %168 = vadd.xlane.f32.xlu0 %v167
    %v169 = vpop.xlane.xlu0 %168
    %v170 = vadd.f32 %v81, %v82
    %171 = vadd.xlane.f32.xlu0 %v170
    %v172 = vpop.xlane.xlu0 %171
    %v173 = vadd.f32 %v83, %v84
    %174 = vadd.xlane.f32.xlu0 %v173
    %v175 = vpop.xlane.xlu0 %174
    %v176 = vadd.f32 %v85, %v86
    %177 = vadd.xlane.f32.xlu0 %v176
    %v178 = vpop.xlane.xlu0 %177
    %v179 = vadd.f32 %v87, %v88
    %180 = vadd.xlane.f32.xlu0 %v179
    %v181 = vpop.xlane.xlu0 %180
    %v182 = vadd.f32 %v89, %v90
    %183 = vadd.xlane.f32.xlu0 %v182
    %v184 = vpop.xlane.xlu0 %183
    %v185 = vadd.f32 %v91, %v92
    %186 = vadd.xlane.f32.xlu0 %v185
    %v187 = vpop.xlane.xlu0 %186
    %v188 = vadd.f32 %v93, %v94
    %189 = vadd.xlane.f32.xlu0 %v188
    %v190 = vpop.xlane.xlu0 %189
    %v191 = vrcp.pop 256.0
    %v192 = vmul.f32 256.0, %v191
    %v193 = vsub.f32 1.0, %v192
    %v194 = vmul.f32 %v191, %v193
    %v195 = vadd.f32 %v191, %v194
    %vm196 = vweird.f32 %v191
    %v197 = vsel %vm196, %v191, %v195
    %v198 = vmul.f32 %v97, %v197
    %v199 = vmul.f32 %v100, %v197
    %v200 = vmul.f32 %v103, %v197
    %v201 = vmul.f32 %v106, %v197
    %v202 = vmul.f32 %v109, %v197
    %v203 = vmul.f32 %v112, %v197
    %v204 = vmul.f32 %v115, %v197
    %v205 = vmul.f32 %v118, %v197
    %v206 = vmul.f32 %v121, %v197
    %v207 = vmul.f32 %v124, %v197
    %v208 = vmul.f32 %v127, %v197
    %v209 = vmul.f32 %v130, %v197
    %v210 = vmul.f32 %v133, %v197
    %v211 = vmul.f32 %v136, %v197
    %v212 = vmul.f32 %v139, %v197
    %v213 = vmul.f32 %v142, %v197
    %v214 = vmul.f32 %v145, %v197
    %v215 = vmul.f32 %v148, %v197
    %v216 = vmul.f32 %v151, %v197
    %v217 = vmul.f32 %v154, %v197
    %v218 = vmul.f32 %v157, %v197
    %v219 = vmul.f32 %v160, %v197
    %v220 = vmul.f32 %v163, %v197
    %v221 = vmul.f32 %v166, %v197
    %v222 = vmul.f32 %v169, %v197
    %v223 = vmul.f32 %v172, %v197
    %v224 = vmul.f32 %v175, %v197
    %v225 = vmul.f32 %v178, %v197
    %v226 = vmul.f32 %v181, %v197
    %v227 = vmul.f32 %v184, %v197
    %v228 = vmul.f32 %v187, %v197
    %v229 = vmul.f32 %v190, %v197
    %v230 = vld [vmem:[%s1] sm:$0xff]
    %v231 = vld [vmem:[%s1 + $0x8] sm:$0xff]
    %v232 = vld [vmem:[%s1 + $0x10] sm:$0xff]
    %v233 = vld [vmem:[%s1 + $0x18] sm:$0xff]
    %v266 = vlaneseq
    %v267 = vand.u32 %v266, 127
    %v268 = vperm.slane %v198, %v267
    %v269 = vadd.s32 %v267, 4294967288
    %v270 = vperm.slane %v199, %v269
    %vm271 = vcmask 130112
    %v272 = vsel %vm271, %v270, %v268
    %v273 = vadd.s32 %v267, 4294967280
    %v274 = vperm.slane %v200, %v273
    %vm275 = vcmask 195712
    %v276 = vsel %vm275, %v274, %v272
    %v277 = vadd.s32 %v267, 4294967272
    %v278 = vperm.slane %v201, %v277
    %vm279 = vcmask 261312
    %v280 = vsel %vm279, %v278, %v276
    %v281 = vperm.slane %v202, %v267
    %v282 = vperm.slane %v203, %v269
    %v283 = vsel %vm271, %v282, %v281
    %v284 = vperm.slane %v204, %v273
    %v285 = vsel %vm275, %v284, %v283
    %v286 = vperm.slane %v205, %v277
    %v287 = vsel %vm279, %v286, %v285
    %v288 = vperm.slane %v206, %v267
    %v289 = vperm.slane %v207, %v269
    %v290 = vsel %vm271, %v289, %v288
    %v291 = vperm.slane %v208, %v273
    %v292 = vsel %vm275, %v291, %v290
    %v293 = vperm.slane %v209, %v277
    %v294 = vsel %vm279, %v293, %v292
    %v295 = vperm.slane %v210, %v267
    %v296 = vperm.slane %v211, %v269
    %v297 = vsel %vm271, %v296, %v295
    %v298 = vperm.slane %v212, %v273
    %v299 = vsel %vm275, %v298, %v297
    %v300 = vperm.slane %v213, %v277
    %v301 = vsel %vm279, %v300, %v299
    %v302 = vperm.slane %v214, %v267
    %v303 = vperm.slane %v215, %v269
    %v304 = vsel %vm271, %v303, %v302
    %v305 = vperm.slane %v216, %v273
    %v306 = vsel %vm275, %v305, %v304
    %v307 = vperm.slane %v217, %v277
    %v308 = vsel %vm279, %v307, %v306
    %v309 = vperm.slane %v218, %v267
    %v310 = vperm.slane %v219, %v269
    %v311 = vsel %vm271, %v310, %v309
    %v312 = vperm.slane %v220, %v273
    %v313 = vsel %vm275, %v312, %v311
    %v314 = vperm.slane %v221, %v277
    %v315 = vsel %vm279, %v314, %v313
    %v316 = vperm.slane %v222, %v267
    %v317 = vperm.slane %v223, %v269
    %v318 = vsel %vm271, %v317, %v316
    %v319 = vperm.slane %v224, %v273
    %v320 = vsel %vm275, %v319, %v318
    %v321 = vperm.slane %v225, %v277
    %v322 = vsel %vm279, %v321, %v320
    %v323 = vperm.slane %v226, %v267
    %v324 = vperm.slane %v227, %v269
    %v325 = vsel %vm271, %v324, %v323
    %v326 = vperm.slane %v228, %v273
    %v327 = vsel %vm275, %v326, %v325
    %v328 = vperm.slane %v229, %v277
    %v329 = vsel %vm279, %v328, %v327
    %vm330 = vcmask 1041409
    %v331 = vsel %vm330, %v287, %v280
    %vm332 = vcmask 1042434
    %v333 = vsel %vm332, %v294, %v331
    %vm334 = vcmask 1043459
    %v335 = vsel %vm334, %v301, %v333
    %vm336 = vcmask 1044484
    %v337 = vsel %vm336, %v308, %v335
    %vm338 = vcmask 1045509
    %v339 = vsel %vm338, %v315, %v337
    %vm340 = vcmask 1046534
    %v341 = vsel %vm340, %v322, %v339
    %vm342 = vcmask 1047559
    %v343 = vsel %vm342, %v329, %v341
    %vm344 = vcmask 261120
    %v345 = vsel %vm344, %v343, 0
    %347 = vmatpush.msra.mxu0 0.0
    %348 = vmatpush.msra.mxu0 0.0
    %349 = vmatpush.msra.mxu0 0.0
    %350 = vmatpush.msra.mxu0 0.0
    %351 = vmatpush.msra.mxu0 0.0
    %352 = vmatpush.msra.mxu0 0.0
    %353 = vmatpush.msra.mxu0 0.0
    %354 = vmatpush.msra.mxu0 0.0
    %355 = vmatpush.msra.mxu0 0.0
    %356 = vmatpush.msra.mxu0 0.0
    %357 = vmatpush.msra.mxu0 0.0
    %358 = vmatpush.msra.mxu0 0.0
    %359 = vmatpush.msra.mxu0 %v233
    %360 = vmatpush.msra.mxu0 %v232
    %361 = vmatpush.msra.mxu0 %v231
    %362 = vmatpush.msra.mxu0 %v230
    %363 = vmatmul.f32.gmra.mxu0 %v345
    %v364 = vpop.f32.mrf.mxu0
    %v365 = vadd.f32 0.0, %v364
    %366 = vdwg.mxu0
    %v367 = vmax.f32 %v365, 0.0
    %v368 = vld [vmem:[%s2] sm:$0xff]
    %v369 = vld [vmem:[%s2 + $0x8] sm:$0xff]
    %v370 = vld [vmem:[%s2 + $0x10] sm:$0xff]
    %v371 = vld [vmem:[%s2 + $0x18] sm:$0xff]
    %v372 = vld [vmem:[%s2 + $0x20] sm:$0xff]
    %v373 = vld [vmem:[%s2 + $0x28] sm:$0xff]
    %v374 = vld [vmem:[%s2 + $0x30] sm:$0xff]
    %v375 = vld [vmem:[%s2 + $0x38] sm:$0xff]
    %v376 = vld [vmem:[%s2 + $0x40] sm:$0xff]
    %v377 = vld [vmem:[%s2 + $0x48] sm:$0xff]
    %v378 = vld [vmem:[%s2 + $0x50] sm:$0xff]
    %v379 = vld [vmem:[%s2 + $0x58] sm:$0xff]
    %v380 = vld [vmem:[%s2 + $0x60] sm:$0xff]
    %v381 = vld [vmem:[%s2 + $0x68] sm:$0xff]
    %v382 = vld [vmem:[%s2 + $0x70] sm:$0xff]
    %v383 = vld [vmem:[%s2 + $0x78] sm:$0xff]
    %384 = vmatpush.msra.mxu0 %v383
    %385 = vmatpush.msra.mxu0 %v382
    %386 = vmatpush.msra.mxu0 %v381
    %387 = vmatpush.msra.mxu0 %v380
    %388 = vmatpush.msra.mxu0 %v379
    %389 = vmatpush.msra.mxu0 %v378
    %390 = vmatpush.msra.mxu0 %v377
    %391 = vmatpush.msra.mxu0 %v376
    %392 = vmatpush.msra.mxu0 %v375
    %393 = vmatpush.msra.mxu0 %v374
    %394 = vmatpush.msra.mxu0 %v373
    %395 = vmatpush.msra.mxu0 %v372
    %396 = vmatpush.msra.mxu0 %v371
    %397 = vmatpush.msra.mxu0 %v370
    %398 = vmatpush.msra.mxu0 %v369
    %399 = vmatpush.msra.mxu0 %v368
    %400 = vmatmul.f32.gmra.mxu0 %v367
    %v401 = vpop.f32.mrf.mxu0
    %v402 = vadd.f32 0.0, %v401
    %403 = vdwg.mxu0
    %v404 = vsub.f32 0.0, %v402
    %v405 = vmul.f32 %v404, 1.442695
    %v406 = vpow.pop %v405
    %v407 = vadd.f32 %v406, 1.0
    %v408 = vrcp.pop %v407
    %v409 = vmul.f32 %v407, %v408
    %v410 = vsub.f32 1.0, %v409
    %v411 = vmul.f32 %v408, %v410
    %v412 = vadd.f32 %v408, %v411
    %vm413 = vweird.f32 %v407
    %vm414 = vweird.f32 %v408
    %vm415 = vmor %vm413, %vm414
    %v416 = vsel %vm415, %v408, %v412
    %v417 = vand.u32 2147483647, %v407
    %vm418 = vcmp.eq.f32.partialorder %v417, 8.507059e+37
    %v419 = vand.u32 %v407, 2147483648
    %v420 = vor.u32 1.1754944e-38, %v419
    %v421 = vsel %vm418, %v420, %v416
    %v422 = vmul.f32 1.0, %v421
    %423 = vst.msk [vmem:[#allocation5] sm:$0xff] %vm344, %v422
    // Predicated region
    $region18: #{tpu_custom_call.1} parent=1 // pred_check
      _
    $region19: #{tpu_custom_call.1} parent=1 // pred_check_branch
      %425 = sbr.rel (0) target = $region21
    $region20: #{tpu_custom_call.1} parent=1 // pred_region
      %427 = vsyncadd [#allocation4], 0
      %s429 = sshll.u32 [#allocation5], 4
      %s430 = int_to_ptr.vmem [resolvable:$true] %s429
      %s431 = sshll.u32 %s3, 4
      %s432 = int_to_ptr.hbm [resolvable:$true] %s431
      %434 = dma.vmem_to_hbm [thread:$0]  %s430, 128, %s432, [#allocation4]
    $region21: #{tpu_custom_call.1} parent=1 // pred_fallthru
      _
    // Predicated region
    $region22: #{tpu_custom_call.1} parent=1 // pred_check
      _
    $region23: #{tpu_custom_call.1} parent=1 // pred_check_branch
      %436 = sbr.rel (0) target = $region25
    $region24: #{tpu_custom_call.1} parent=1 // pred_region
      %438 = dma.done [#allocation4], 128
    $region25: #{tpu_custom_call.1} parent=1 // pred_fallthru
      _
    %439 = vsyncpa [#allocation3], 1
    %440 = vsyncpa [#allocation4], 1

</llo_original>
